<compile_context>
chip_gen: v6e
topology: v6e:2x2x1
jax: 0.10.0
libtpu: 0.0.40
codegen_flags: <defaults>
</compile_context>

<pallas_src>
import jax
import jax.numpy as jnp
from jax.experimental import pallas as pl
from jax.experimental.pallas import tpu as pltpu

HID_OW = 200     # _OrderOfMagnitudeModel hidden size
MAX_ORDER = 5
HID_SD = 100     # _ScalarModel hidden size
SLAB_LANES = 256
SLAB_ROWS = 8


# --------------------------------------------------------------------------
# Kernel
# --------------------------------------------------------------------------
def _kernel(slab_ref, rr_ref, out_ref):
    # ---- _OrderOfMagnitudeModel(hidden=200, max_order=5) ----
    # dummy = ones(1,1)  =>  Linear(1,200)(dummy) == W1[:,0] + b1 (pre-folded in row 0).
    h = jnp.maximum(slab_ref[0:1, :], 0.0)                      # (1, 256); carrier lane -> 1.0
    w2 = slab_ref[1:1 + MAX_ORDER, :]                           # (5, 256); b2 folded at lane 200
    logits = jnp.sum(h * w2, axis=1, keepdims=True)             # (5, 1) VPU mul + lane reduce
    logits = jnp.maximum(logits, 0.0)                           # ReLU before softmax

    # magnitudes = 10 ** arange(5), built exactly from an iota (no constant DMA)
    j = jax.lax.broadcasted_iota(jnp.int32, (MAX_ORDER, 1), 0)
    mag = jnp.where(j == 0, 1.0,
          jnp.where(j == 1, 10.0,
          jnp.where(j == 2, 100.0,
          jnp.where(j == 3, 1000.0, 10000.0)))).astype(jnp.float32)

    m = jnp.max(logits, axis=0, keepdims=True)                  # (1, 1) stabilized softmax
    e = jnp.exp(logits - m)                                     # (5, 1)
    denom = jnp.sum(e, axis=0, keepdims=True)                   # (1, 1)
    # exact divide (approx reciprocal would blow the 1e-5 tolerance on a ~1e4 value)
    collision_w = jnp.sum(e * mag, axis=0, keepdims=True) / denom   # (1, 1)

    # ---- _ScalarModel(hidden=100) + sigmoid + robot_radius ----
    hs = jnp.maximum(slab_ref[6:7, :], 0.0)                     # (1, 256); carrier lane -> 1.0
    w2s = slab_ref[7:8, :]                                      # (1, 256); bias folded at lane 100
    s = jnp.sum(hs * w2s, axis=1, keepdims=True)                # (1, 1)
    cost_eps = 1.0 / (1.0 + jnp.exp(-s)) + rr_ref[0]            # sigmoid + runtime radius

    # single lane-dense output: lane 0 = collision_w, lane 1 = cost_eps
    lane = jax.lax.broadcasted_iota(jnp.int32, (1, 128), 1)
    out_ref[...] = jnp.where(lane == 0, collision_w,
                   jnp.where(lane == 1, cost_eps, 0.0))


# --------------------------------------------------------------------------
# Parameter handling
# --------------------------------------------------------------------------
def init_params(key):
    """Deterministic synthetic parameters in native PyTorch nn.Linear layout."""
    ks = jax.random.split(key, 8)

    def unif(k, shape, fan_in):
        bound = float(1.0 / (fan_in ** 0.5))
        return jax.random.uniform(k, shape, jnp.float32, -bound, bound)

    return {
        # _OrderOfMagnitudeModel: Linear(1,200) -> ReLU -> Linear(200,5) -> ReLU
        "ow_w1": unif(ks[0], (HID_OW, 1), 1),
        "ow_b1": unif(ks[1], (HID_OW,), 1),
        "ow_w2": unif(ks[2], (MAX_ORDER, HID_OW), HID_OW),
        "ow_b2": unif(ks[3], (MAX_ORDER,), HID_OW),
        # _ScalarModel: Linear(1,100) -> ReLU -> Linear(100,1)
        "sd_w1": unif(ks[4], (HID_SD, 1), 1),
        "sd_b1": unif(ks[5], (HID_SD,), 1),
        "sd_w2": unif(ks[6], (1, HID_SD), HID_SD),
        "sd_b2": unif(ks[7], (1,), HID_SD),
    }


def pack_params(p):
    """Pack all parameters into one lane-aligned (8, 256) f32 slab (done once)."""
    f32 = jnp.float32
    z = lambda *s: jnp.zeros(s, f32)
    one = jnp.ones((1,), f32)

    row0 = jnp.concatenate(
        [p["ow_w1"][:, 0] + p["ow_b1"], one, z(SLAB_LANES - HID_OW - 1)])
    ow2 = jnp.concatenate(
        [p["ow_w2"], p["ow_b2"][:, None], z(MAX_ORDER, SLAB_LANES - HID_OW - 1)], axis=1)
    row6 = jnp.concatenate(
        [p["sd_w1"][:, 0] + p["sd_b1"], one, z(SLAB_LANES - HID_SD - 1)])
    row7 = jnp.concatenate(
        [p["sd_w2"][0, :], p["sd_b2"], z(SLAB_LANES - HID_SD - 1)])

    slab = jnp.concatenate(
        [row0[None, :], ow2, row6[None, :], row7[None, :]], axis=0)
    assert slab.shape == (SLAB_ROWS, SLAB_LANES)
    return slab.astype(f32)


# --------------------------------------------------------------------------
# Forward
# --------------------------------------------------------------------------
@jax.jit
def _packed_forward(slab, robot_radius):
    out = pl.pallas_call(
        _kernel,
        out_shape=jax.ShapeDtypeStruct((1, 128), jnp.float32),
        in_specs=[
            pl.BlockSpec(memory_space=pltpu.MemorySpace.VMEM),   # packed param slab
            pl.BlockSpec(memory_space=pltpu.MemorySpace.SMEM),   # robot_radius scalar
        ],
        out_specs=pl.BlockSpec(memory_space=pltpu.MemorySpace.VMEM),
    )(slab, robot_radius)
    return out[:, 0:1], out[:, 1:2]


def scalar_collision_forward(slab, inputs_dict, robot_radius):
    # `inputs_dict` is ignored, matching the PyTorch forward signature.
    del inputs_dict
    rr = jnp.asarray(robot_radius, jnp.float32).reshape((1,))
    collision_w, cost_eps = _packed_forward(slab, rr)
    return {"collision_w": collision_w, "cost_eps": cost_eps}


# --------------------------------------------------------------------------
# Plain-JAX reference (mirrors the PyTorch module)
# --------------------------------------------------------------------------
def _reference(params, robot_radius):
    h = jnp.maximum(params["ow_w1"][:, 0] + params["ow_b1"], 0.0)          # (200,)
    logits = jnp.maximum(params["ow_w2"] @ h + params["ow_b2"], 0.0)       # (5,)
    p = jax.nn.softmax(logits)
    magnitudes = 10.0 ** jnp.arange(MAX_ORDER, dtype=jnp.float32)
    collision_w = jnp.sum(p * magnitudes).reshape(1, 1)

    hs = jnp.maximum(params["sd_w1"][:, 0] + params["sd_b1"], 0.0)         # (100,)
    s = params["sd_w2"][0] @ hs + params["sd_b2"][0]
    cost_eps = (1.0 / (1.0 + jnp.exp(-s)) + robot_radius).reshape(1, 1)
    return {"collision_w": collision_w, "cost_eps": cost_eps}


if __name__ == "__main__":
    key = jax.random.PRNGKey(0)
    params = init_params(key)
    robot_radius = 0.4

    slab = pack_params(params)

    # The module's forward takes a Dict[str, Tensor] it never uses.
    dummy_inputs = {"unused": jnp.ones((2, 4), jnp.float32)}

    out = scalar_collision_forward(slab, dummy_inputs, robot_radius)
    jax.block_until_ready(out)

    ref = _reference(params, robot_radius)
    assert out["collision_w"].shape == (1, 1) and out["cost_eps"].shape == (1, 1)
    assert jnp.allclose(out["collision_w"], ref["collision_w"], rtol=1e-5, atol=1e-5)
    assert jnp.allclose(out["cost_eps"], ref["cost_eps"], rtol=1e-5, atol=1e-6)

    # Second call with a different radius must NOT retrace/recompile (runtime scalar).
    out2 = scalar_collision_forward(slab, dummy_inputs, 1.25)
    jax.block_until_ready(out2)
    ref2 = _reference(params, 1.25)
    assert jnp.allclose(out2["collision_w"], ref2["collision_w"], rtol=1e-5, atol=1e-5)
    assert jnp.allclose(out2["cost_eps"], ref2["cost_eps"], rtol=1e-5, atol=1e-6)

    print("KERNEL_OK")
</pallas_src>

<mosaic_0001>
module attributes {stable_mosaic.version = 11 : i64} {
  func.func @_kernel(%arg0: memref<8x256xf32, #tpu.memory_space<vmem>>, %arg1: memref<1xf32, #tpu.memory_space<smem>>, %arg2: memref<1x128xf32, #tpu.memory_space<vmem>>) attributes {dimension_semantics = [], scalar_prefetch = 0 : i64, scratch_operands = 0 : i64, tpu.core_type = #tpu.core_type<tc>} {
    %c0 = arith.constant 0 : index
    %c0_0 = arith.constant 0 : index
    %0 = vector.load %arg0[%c0, %c0_0] : memref<8x256xf32, #tpu.memory_space<vmem>>, vector<1x256xf32>
    %cst = arith.constant 0.000000e+00 : f32
    %1 = vector.broadcast %cst : f32 to vector<1x256xf32>
    %2 = arith.maximumf %0, %1 : vector<1x256xf32>
    %c1 = arith.constant 1 : index
    %c0_1 = arith.constant 0 : index
    %3 = vector.load %arg0[%c1, %c0_1] : memref<8x256xf32, #tpu.memory_space<vmem>>, vector<5x256xf32>
    %4 = vector.broadcast %2 : vector<1x256xf32> to vector<5x256xf32>
    %5 = arith.mulf %4, %3 : vector<5x256xf32>
    %cst_2 = arith.constant dense<0.000000e+00> : vector<5xf32>
    %6 = vector.multi_reduction <add>, %5, %cst_2 [1] : vector<5x256xf32> to vector<5xf32>
    %7 = vector.shape_cast %6 : vector<5xf32> to vector<5x1xf32>
    %cst_3 = arith.constant 0.000000e+00 : f32
    %8 = vector.broadcast %cst_3 : f32 to vector<5x1xf32>
    %9 = arith.maximumf %7, %8 : vector<5x1xf32>
    %10 = tpu.iota {dimensions = array<i32: 0>} : vector<5x1xi32>
    %c0_i32 = arith.constant 0 : i32
    %11 = vector.broadcast %c0_i32 : i32 to vector<5x1xi32>
    %12 = arith.cmpi eq, %10, %11 : vector<5x1xi32>
    %c1_i32 = arith.constant 1 : i32
    %13 = vector.broadcast %c1_i32 : i32 to vector<5x1xi32>
    %14 = arith.cmpi eq, %10, %13 : vector<5x1xi32>
    %c2_i32 = arith.constant 2 : i32
    %15 = vector.broadcast %c2_i32 : i32 to vector<5x1xi32>
    %16 = arith.cmpi eq, %10, %15 : vector<5x1xi32>
    %c3_i32 = arith.constant 3 : i32
    %17 = vector.broadcast %c3_i32 : i32 to vector<5x1xi32>
    %18 = arith.cmpi eq, %10, %17 : vector<5x1xi32>
    %cst_4 = arith.constant 1.000000e+03 : f32
    %cst_5 = arith.constant 1.000000e+04 : f32
    %19 = vector.broadcast %cst_4 : f32 to vector<5x1xf32>
    %20 = vector.broadcast %cst_5 : f32 to vector<5x1xf32>
    %21 = arith.select %18, %19, %20 : vector<5x1xi1>, vector<5x1xf32>
    %cst_6 = arith.constant 1.000000e+02 : f32
    %22 = vector.broadcast %cst_6 : f32 to vector<5x1xf32>
    %23 = arith.select %16, %22, %21 : vector<5x1xi1>, vector<5x1xf32>
    %cst_7 = arith.constant 1.000000e+01 : f32
    %24 = vector.broadcast %cst_7 : f32 to vector<5x1xf32>
    %25 = arith.select %14, %24, %23 : vector<5x1xi1>, vector<5x1xf32>
    %cst_8 = arith.constant 1.000000e+00 : f32
    %26 = vector.broadcast %cst_8 : f32 to vector<5x1xf32>
    %27 = arith.select %12, %26, %25 : vector<5x1xi1>, vector<5x1xf32>
    %cst_9 = arith.constant dense<0xFF800000> : vector<1xf32>
    %28 = vector.multi_reduction <maximumf>, %9, %cst_9 [0] : vector<5x1xf32> to vector<1xf32>
    %29 = vector.shape_cast %28 : vector<1xf32> to vector<1x1xf32>
    %30 = vector.broadcast %29 : vector<1x1xf32> to vector<5x1xf32>
    %31 = arith.subf %9, %30 : vector<5x1xf32>
    %32 = math.exp %31 : vector<5x1xf32>
    %cst_10 = arith.constant dense<0.000000e+00> : vector<1xf32>
    %33 = vector.multi_reduction <add>, %32, %cst_10 [0] : vector<5x1xf32> to vector<1xf32>
    %34 = vector.shape_cast %33 : vector<1xf32> to vector<1x1xf32>
    %35 = arith.mulf %32, %27 : vector<5x1xf32>
    %cst_11 = arith.constant dense<0.000000e+00> : vector<1xf32>
    %36 = vector.multi_reduction <add>, %35, %cst_11 [0] : vector<5x1xf32> to vector<1xf32>
    %37 = vector.shape_cast %36 : vector<1xf32> to vector<1x1xf32>
    %38 = arith.divf %37, %34 : vector<1x1xf32>
    %c6 = arith.constant 6 : index
    %c0_12 = arith.constant 0 : index
    %39 = vector.load %arg0[%c6, %c0_12] : memref<8x256xf32, #tpu.memory_space<vmem>>, vector<1x256xf32>
    %cst_13 = arith.constant 0.000000e+00 : f32
    %40 = vector.broadcast %cst_13 : f32 to vector<1x256xf32>
    %41 = arith.maximumf %39, %40 : vector<1x256xf32>
    %c7 = arith.constant 7 : index
    %c0_14 = arith.constant 0 : index
    %42 = vector.load %arg0[%c7, %c0_14] : memref<8x256xf32, #tpu.memory_space<vmem>>, vector<1x256xf32>
    %43 = arith.mulf %41, %42 : vector<1x256xf32>
    %cst_15 = arith.constant dense<0.000000e+00> : vector<1xf32>
    %44 = vector.multi_reduction <add>, %43, %cst_15 [1] : vector<1x256xf32> to vector<1xf32>
    %45 = vector.shape_cast %44 : vector<1xf32> to vector<1x1xf32>
    %cst_16 = arith.constant 0.000000e+00 : f32
    %46 = vector.broadcast %cst_16 : f32 to vector<1x1xf32>
    %47 = arith.subf %46, %45 : vector<1x1xf32>
    %48 = math.exp %47 : vector<1x1xf32>
    %cst_17 = arith.constant 1.000000e+00 : f32
    %49 = vector.broadcast %cst_17 : f32 to vector<1x1xf32>
    %50 = arith.addf %49, %48 : vector<1x1xf32>
    %cst_18 = arith.constant 1.000000e+00 : f32
    %51 = vector.broadcast %cst_18 : f32 to vector<1x1xf32>
    %52 = arith.divf %51, %50 : vector<1x1xf32>
    %c0_19 = arith.constant 0 : index
    %53 = memref.load %arg1[%c0_19] : memref<1xf32, #tpu.memory_space<smem>>
    %54 = vector.broadcast %53 : f32 to vector<1x1xf32>
    %55 = arith.addf %52, %54 : vector<1x1xf32>
    %56 = tpu.iota {dimensions = array<i32: 1>} : vector<1x128xi32>
    %c0_i32_20 = arith.constant 0 : i32
    %57 = vector.broadcast %c0_i32_20 : i32 to vector<1x128xi32>
    %58 = arith.cmpi eq, %56, %57 : vector<1x128xi32>
    %c1_i32_21 = arith.constant 1 : i32
    %59 = vector.broadcast %c1_i32_21 : i32 to vector<1x128xi32>
    %60 = arith.cmpi eq, %56, %59 : vector<1x128xi32>
    %cst_22 = arith.constant 0.000000e+00 : f32
    %61 = vector.shape_cast %55 : vector<1x1xf32> to vector<1x1xf32>
    %62 = vector.broadcast %61 : vector<1x1xf32> to vector<1x128xf32>
    %63 = vector.broadcast %cst_22 : f32 to vector<1x128xf32>
    %64 = arith.select %60, %62, %63 : vector<1x128xi1>, vector<1x128xf32>
    %65 = vector.shape_cast %38 : vector<1x1xf32> to vector<1x1xf32>
    %66 = vector.broadcast %65 : vector<1x1xf32> to vector<1x128xf32>
    %67 = arith.select %58, %66, %64 : vector<1x128xi1>, vector<1x128xf32>
    %c0_23 = arith.constant 0 : index
    %c0_24 = arith.constant 0 : index
    %68 = vector.load %arg2[%c0_23, %c0_24] : memref<1x128xf32, #tpu.memory_space<vmem>>, vector<1x128xf32>
    tpu.vector_store %arg2[%c0_23, %c0_24], %67 {strides = array<i32>} : memref<1x128xf32, #tpu.memory_space<vmem>>, vector<1x128xf32>,
    return
  }
}

</mosaic_0001>

<llo_original>
// kernel: _packed_forward.1
$region0: #{_packed_forward.1}
  #allocation0 [shape = 'u32[]', space=smem, size = 0x4, offset = 0x4, fixed_abs, tag = 'smem constant byte address 0x4 - core index']
  #allocation1 [shape = 'u32[144,128]{1,0:T(1,128)}', space=vmem, size = 0x12000, scoped, tag = 'internal scratch']
  #allocation2 [shape = 'f32[1]{0:T(128)S(6)}', space=smem, size = 0x200, scoped, tag = 'scoped memory for _packed_forward.1']
  %s0 = inlined_call_operand.hbm [shape: f32[8,256], index: 0, kind: input, shape index: {}]
  %s1 = inlined_call_operand.<no memory space> [shape: f32[1], index: 1, kind: input, shape index: {}]
  %s2 = inlined_call_operand.vmem [shape: f32[1,128], index: 2, kind: output, shape index: {}]
  %s3 = sld [smem:[#allocation0]]
  $region22: #{_packed_forward.1} parent=0
    _
  %s5 = ssub.s32 1, %s3
  %s6 = scalar_select 0, %s5, %s3
  %7 = sst [smem:[#allocation2]] %s1
  $region1: #{_packed_forward.1} parent=0
    #allocation3 [shape = 'u8[8192]{0}', space=vmem, size = 0x2000, scoped, tag = 'input window, operand 0, single buffered']
    #allocation4 [shape = 's32[1]{0}', space=sflag, size = 0x4, scoped, tag = 'scoped memory for _packed_forward.1']
    %8 = vsyncpa [#allocation4], 0
    // Predicated region
    $region2: #{_packed_forward.1} parent=1 // pred_check
      _
    $region3: #{_packed_forward.1} parent=1 // pred_check_branch
      %10 = sbr.rel (0) target = $region5
    $region4: #{_packed_forward.1} parent=1 // pred_region
      %s12 = ssub.s32 256, 256
      %13 = vsyncadd [#allocation4], %s12
      %s15 = sshll.u32 [#allocation3], 4
      %s16 = int_to_ptr.vmem [resolvable:$true] %s15
      %18 = dma.hbm_to_vmem [thread:$0]  %s0, 256, %s16, [#allocation4]
    $region5: #{_packed_forward.1} parent=1 // pred_fallthru
      _
    // Predicated region
    $region6: #{_packed_forward.1} parent=1 // pred_check
      _
    $region7: #{_packed_forward.1} parent=1 // pred_check_branch
      %20 = sbr.rel (0) target = $region9
    $region8: #{_packed_forward.1} parent=1 // pred_region
      _
    $region9: #{_packed_forward.1} parent=1 // pred_fallthru
      _
    // Predicated region
    $region10: #{_packed_forward.1} parent=1 // pred_check
      _
    $region11: #{_packed_forward.1} parent=1 // pred_check_branch
      %22 = sbr.rel (0) target = $region13
    $region12: #{_packed_forward.1} parent=1 // pred_region
      %23 = dma.done [#allocation4], 256
    $region13: #{_packed_forward.1} parent=1 // pred_fallthru
      _
    %v24 = vld [vmem:[#allocation3] ss:$8 sm:$0x3]
    %v25 = vmax.f32 %v24, 0.0
    %v26 = vld [vmem:[#allocation3] sm:$0x3e]
    %v27 = vld [vmem:[#allocation3 + $0x8] sm:$0x3e]
    %v29 = vlaneseq
    %v30 = vshrl.u32 %v29, 7
    %v31 = vsub.s32 0, %v30
    %v32 = vrot.slane %v25, %v31
    %v33 = vlaneseq
    %v34 = vshrl.u32 %v33, 7
    %v35 = vsub.s32 1, %v34
    %v36 = vrot.slane %v25, %v35
    %v39 = vmul.f32 %v32, %v26
    %v40 = vmul.f32 %v36, %v27
    %vm41 = vcmask 1045505
    %v42 = vsel %vm41, %v39, 0.0
    %v43 = vsel %vm41, %v40, 0.0
    %v44 = vadd.f32 %v42, %v43
    %45 = vadd.xlane.f32.xlu0 %v44
    %v46 = vpop.xlane.xlu0 %45
    %v47 = vmax.f32 %v46, 0.0
    %v48 = vlaneseq
    %v49 = vshrl.u32 %v48, 7
    %vm50 = vcmp.eq.s32.totalorder %v49, 0
    %vm51 = vcmp.eq.s32.totalorder %v49, 1
    %vm52 = vcmp.eq.s32.totalorder %v49, 2
    %vm53 = vcmp.eq.s32.totalorder %v49, 3
    %v54 = vsel %vm53, 1000.0, 10000.0
    %v55 = vsel %vm52, 100.0, %v54
    %v56 = vsel %vm51, 10.0, %v55
    %v57 = vsel %vm50, 1.0, %v56
    %v58 = vsel %vm41, %v47, -inf
    %v59 = vrot.slane %v58, 4
    %v60 = vmax.f32 %v58, %v59
    %v61 = vrot.slane %v60, 2
    %v62 = vmax.f32 %v60, %v61
    %v63 = vrot.slane %v62, 1
    %v64 = vmax.f32 %v62, %v63
    %v65 = vsub.f32 %v47, %v64
    %v66 = vmul.f32 %v65, 1.442695
    %v67 = vpow.pop %v66
    %v69 = vrot.slane %v67, 1
    %vm71 = vcmask 1044480
    %v72 = vsel %vm71, %v69, 0.0
    %v73 = vrot.slane %v72, 4
    %v74 = vadd.f32 %v72, %v73
    %v75 = vrot.slane %v74, 2
    %v76 = vadd.f32 %v74, %v75
    %v77 = vrot.slane %v76, 1
    %v78 = vadd.f32 %v76, %v77
    %v80 = vrot.slane %v57, 7
    %v82 = vmul.f32 %v67, %v80
    %v84 = vrot.slane %v82, 1
    %vm86 = vcmask 4096
    %v87 = vsel %vm86, %v84, 0.0
    %v88 = vrot.slane %v87, 4
    %v89 = vadd.f32 %v87, %v88
    %v90 = vrot.slane %v89, 2
    %v91 = vadd.f32 %v89, %v90
    %v92 = vrot.slane %v91, 1
    %v93 = vadd.f32 %v91, %v92
    %v94 = vrcp.pop %v78
    %v95 = vmul.f32 %v93, %v94
    %s96 = scalar_lea.vmem [#allocation3], 6
    %v97 = vld [vmem:[%s96] ss:$8 sm:$0x3]
    %v98 = vmax.f32 %v97, 0.0
    %s99 = scalar_lea.vmem [#allocation3], 7
    %v100 = vld [vmem:[%s99] ss:$8 sm:$0x3]
    %v101 = vmul.f32 %v98, %v100
    %v103 = vlaneseq
    %v104 = vshrl.u32 %v103, 7
    %v105 = vsub.s32 0, %v104
    %v106 = vrot.slane %v101, %v105
    %v107 = vlaneseq
    %v108 = vshrl.u32 %v107, 7
    %v109 = vsub.s32 1, %v108
    %v110 = vrot.slane %v101, %v109
    %vm113 = vcmask 1040384
    %v114 = vsel %vm113, %v106, 0.0
    %v115 = vsel %vm113, %v110, 0.0
    %v116 = vadd.f32 %v114, %v115
    %117 = vadd.xlane.f32.xlu0 %v116
    %v118 = vpop.xlane.xlu0 %117
    %v119 = vsub.f32 0.0, %v118
    %v120 = vmul.f32 %v119, 1.442695
    %v121 = vpow.pop %v120
    %v122 = vadd.f32 %v121, 1.0
    %v123 = vrcp.pop %v122
    %v124 = vmul.f32 1.0, %v123
    %s125 = sld [smem:[#allocation2]]
    %v126 = vstv %s125
    %v127 = vadd.f32 %v124, %v126
    %v128 = vlaneseq
    %v129 = vand.u32 %v128, 127
    %vm130 = vcmp.eq.s32.totalorder %v129, 0
    %vm131 = vcmp.eq.s32.totalorder %v129, 1
    %v132 = vsel %vm131, %v127, 0.0
    %134 = vset.pattern.permute.xlu0 0
    %135 = vperm.xlu0 %134, %v95
    %v136 = vpop.permute.xlu0 %135
    %v138 = vsel %vm130, %v136, %v132
    %139 = vst [vmem:[%s2] sm:$0x1] %v138
    // Predicated region
    $region14: #{_packed_forward.1} parent=1 // pred_check
      _
    $region15: #{_packed_forward.1} parent=1 // pred_check_branch
      %141 = sbr.rel (0) target = $region17
    $region16: #{_packed_forward.1} parent=1 // pred_region
      _
    $region17: #{_packed_forward.1} parent=1 // pred_fallthru
      _
    // Predicated region
    $region18: #{_packed_forward.1} parent=1 // pred_check
      _
    $region19: #{_packed_forward.1} parent=1 // pred_check_branch
      %143 = sbr.rel (0) target = $region21
    $region20: #{_packed_forward.1} parent=1 // pred_region
      _
    $region21: #{_packed_forward.1} parent=1 // pred_fallthru
      _
    %144 = vsyncpa [#allocation4], 1

</llo_original>
